<compile_context>
chip_gen: v7x
topology: tpu7x:2x2x1
jax: 0.10.0
libtpu: 0.0.40
codegen_flags: <defaults>
</compile_context>

<pallas_src>
import math

import jax
import jax.numpy as jnp
from jax import lax
from jax.experimental import pallas as pl
from jax.experimental.pallas import tpu as pltpu

_LANE = 128
_SUBLANE = 8


def _betalif_kernel(threshold, tt, spike_dtype, mem_dtype, beta_time_varying):
    thr = float(threshold)  # plain Python scalar -> baked literal (no captured consts)

    def kernel(x_ref, beta_ref, mem0_ref, spike_ref, mem_ref, carry_ref):
        # Grid axis 1 is the sequential time axis; when it restarts, a new
        # independent feature block begins -> load the initial membrane.
        @pl.when(pl.program_id(1) == 0)
        def _():
            carry_ref[...] = mem0_ref[...].astype(jnp.float32)

        if not beta_time_varying:
            beta_blk = beta_ref[...].astype(jnp.float32)  # hoisted: 1 load / block

        def step(i, mem):
            x = x_ref[i].astype(jnp.float32)
            b = beta_ref[i].astype(jnp.float32) if beta_time_varying else beta_blk
            mem = b * mem + x                       # integrate
            shifted = mem - thr
            spk = shifted > 0.0                     # Heaviside fire (forward)
            mem = jnp.where(spk, shifted, mem)      # subtract reset where fired
            spike_ref[i] = spk.astype(spike_dtype)
            mem_ref[i] = mem.astype(mem_dtype)
            return mem

        # fori_loop bounds vreg live ranges (vs a fully-unrolled Python loop);
        # membrane is the only loop carry, written back to VMEM once per block.
        carry_ref[...] = lax.fori_loop(0, tt, step, carry_ref[...],
                                       unroll=min(8, tt))

    return kernel


def beta_lif_forward(input_current, beta, threshold=1.0, *, mem_init=None,
                     time_block=32, sublane_block=128,
                     spike_dtype=None, mem_dtype=None):
    """Run BetaLIF over a [T, *feature] time window.

    input_current : [T, *feat]
    beta          : either [T, *feat] (streamed per step, the module's literal
                    signature) or [*feat] / scalar (time-invariant -> hoisted,
                    loaded once per feature block).
    mem_init      : optional [*feat] initial membrane potential (default 0).
    Returns (spikes, mems), shapes [T, *feat]; mems[-1] is the final membrane
    state (post-reset) to pass as mem_init of the next chunk.
    """
    T = input_current.shape[0]
    feat_shape = input_current.shape[1:]
    F = int(math.prod(feat_shape))
    dtype = input_current.dtype
    spike_dtype = jnp.dtype(dtype if spike_dtype is None else spike_dtype)
    mem_dtype = jnp.dtype(dtype if mem_dtype is None else mem_dtype)

    beta = jnp.asarray(beta)
    if beta.shape == input_current.shape:
        beta_tv = True
    elif beta.shape == feat_shape or beta.ndim == 0:
        beta_tv = False
    else:
        raise ValueError(f"beta shape {beta.shape} must match input "
                         f"{input_current.shape} or features {feat_shape}")

    # ---- tiling ---------------------------------------------------------
    n_tblocks = pl.cdiv(T, max(1, time_block))
    tt = pl.cdiv(T, n_tblocks)                 # balanced time blocks, minimal pad
    T_pad = n_tblocks * tt

    S = pl.cdiv(F, _LANE)                      # sublane rows of width 128
    nb = pl.cdiv(S, sublane_block)
    if S >= 2 * _SUBLANE:
        nb = max(nb, 2)                        # >=2 feature blocks -> both v7x TCs busy
    tile_s = pl.cdiv(pl.cdiv(S, nb), _SUBLANE) * _SUBLANE
    n_fblocks = pl.cdiv(S, tile_s)
    S_pad = n_fblocks * tile_s
    F_pad = S_pad * _LANE

    # ---- layout: [T, F] -> pad -> [T_pad, S_pad, 128] --------------------
    def to_tsl(a):
        a = a.reshape(T, F)
        if T_pad != T or F_pad != F:
            a = jnp.pad(a, ((0, T_pad - T), (0, F_pad - F)))
        return a.reshape(T_pad, S_pad, _LANE)

    def to_sl(a):
        a = a.reshape(F)
        if F_pad != F:
            a = jnp.pad(a, (0, F_pad - F))
        return a.reshape(S_pad, _LANE)

    tspec = pl.BlockSpec((tt, tile_s, _LANE), lambda s, t: (t, s, 0))
    fspec = pl.BlockSpec((tile_s, _LANE), lambda s, t: (s, 0))

    x = to_tsl(input_current)
    if beta_tv:
        b = to_tsl(beta)
        beta_spec = tspec
    else:
        b = to_sl(jnp.broadcast_to(beta, feat_shape).astype(dtype))
        beta_spec = fspec
    mem0 = (jnp.zeros((S_pad, _LANE), jnp.float32) if mem_init is None
            else to_sl(jnp.asarray(mem_init).astype(jnp.float32)))

    # ---- VMEM budget (double-buffered pipeline) ---------------------------
    blk = tt * tile_s * _LANE
    fblk = tile_s * _LANE
    in_bytes = (blk * x.dtype.itemsize
                + (blk if beta_tv else fblk) * b.dtype.itemsize
                + fblk * 4)
    out_bytes = blk * (spike_dtype.itemsize + mem_dtype.itemsize)
    vmem_needed = 2 * (in_bytes + out_bytes) + fblk * 4
    vmem_limit = int(min(max(vmem_needed * 5 // 4 + (2 << 20), 32 << 20), 96 << 20))

    out_shape = (
        jax.ShapeDtypeStruct((T_pad, S_pad, _LANE), spike_dtype),
        jax.ShapeDtypeStruct((T_pad, S_pad, _LANE), mem_dtype),
    )

    spikes, mems = pl.pallas_call(
        _betalif_kernel(float(threshold), tt, spike_dtype, mem_dtype, beta_tv),
        out_shape=out_shape,
        grid_spec=pltpu.PrefetchScalarGridSpec(
            num_scalar_prefetch=0,
            grid=(n_fblocks, T_pad // tt),     # (parallel features, sequential time)
            in_specs=[tspec, beta_spec, fspec],
            out_specs=(tspec, tspec),
            scratch_shapes=[pltpu.VMEM((tile_s, _LANE), jnp.float32)],
        ),
        compiler_params=pltpu.CompilerParams(
            dimension_semantics=("parallel", "arbitrary"),
            vmem_limit_bytes=vmem_limit,
        ),
    )(x, b, mem0)

    def unpack(y):
        y = y[:T].reshape(T, F_pad)[:, :F]
        return y.reshape((T,) + feat_shape)

    return unpack(spikes), unpack(mems)


def _reference(input_current, beta, threshold=1.0, mem0=None):
    """Pure-JAX reference of the same recurrence (for verification)."""
    mem_init = jnp.zeros_like(input_current[0]) if mem0 is None else mem0

    def step(mem, xs):
        i_t, b_t = xs
        mem = b_t * mem + i_t
        spk = (mem - threshold > 0.0).astype(mem.dtype)
        mem = mem - threshold * spk
        return mem, (spk, mem)

    _, (spikes, mems) = lax.scan(step, mem_init, (input_current, beta))
    return spikes, mems


if __name__ == "__main__":
    key = jax.random.PRNGKey(0)
    k1, k2, k3, k4, k5 = jax.random.split(key, 5)

    # Case 1: per-timestep beta (module's literal signature), aligned shapes.
    T, B, N = 8, 8, 128
    x1 = jax.random.normal(k1, (T, B, N), dtype=jnp.float32) * 1.5
    b1 = jax.random.uniform(k2, (T, B, N), dtype=jnp.float32, minval=0.1, maxval=0.99)
    fwd1 = jax.jit(lambda x, b: beta_lif_forward(x, b, threshold=1.0))
    s1, m1 = fwd1(x1, b1)
    jax.block_until_ready((s1, m1))
    rs1, rm1 = _reference(x1, b1, threshold=1.0)
    assert jnp.allclose(s1, rs1, atol=1e-6), "spike mismatch (streamed beta)"
    assert jnp.allclose(m1, rm1, atol=1e-5), "membrane mismatch (streamed beta)"

    # Case 2: time-invariant (hoisted) beta, ragged shapes, explicit mem_init.
    T2, B2, N2 = 5, 3, 50
    x2 = jax.random.normal(k3, (T2, B2, N2), dtype=jnp.float32) * 1.5
    b2 = jax.random.uniform(k4, (B2, N2), dtype=jnp.float32, minval=0.1, maxval=0.99)
    m0 = jax.random.normal(k5, (B2, N2), dtype=jnp.float32) * 0.2
    fwd2 = jax.jit(lambda x, b, m: beta_lif_forward(x, b, threshold=0.8, mem_init=m))
    s2, m2 = fwd2(x2, b2, m0)
    jax.block_until_ready((s2, m2))
    rs2, rm2 = _reference(x2, jnp.broadcast_to(b2, x2.shape), threshold=0.8, mem0=m0)
    assert jnp.allclose(s2, rs2, atol=1e-6), "spike mismatch (hoisted beta)"
    assert jnp.allclose(m2, rm2, atol=1e-5), "membrane mismatch (hoisted beta)"

    print("KERNEL_OK")
</pallas_src>

<mosaic_0001>
module attributes {stable_mosaic.version = 11 : i64} {
  func.func @kernel(%arg0: i32, %arg1: i32, %arg2: memref<8x8x128xf32, #tpu.memory_space<vmem>>, %arg3: memref<8x8x128xf32, #tpu.memory_space<vmem>>, %arg4: memref<8x128xf32, #tpu.memory_space<vmem>>, %arg5: memref<8x8x128xf32, #tpu.memory_space<vmem>>, %arg6: memref<8x8x128xf32, #tpu.memory_space<vmem>>, %arg7: memref<8x128xf32, #tpu.memory_space<vmem>>) attributes {dimension_semantics = [#tpu.dimension_semantics<parallel>, #tpu.dimension_semantics<arbitrary>], iteration_bounds = array<i64: 1, 1>, scalar_prefetch = 0 : i64, scratch_operands = 1 : i64, tpu.core_type = #tpu.core_type<tc>, window_params = [{transform_indices = @transform_0, window_bounds = array<i64: 8, 8, 128>}, {transform_indices = @transform_1, window_bounds = array<i64: 8, 8, 128>}, {transform_indices = @transform_2, window_bounds = array<i64: 8, 128>}, {transform_indices = @transform_3, window_bounds = array<i64: 8, 8, 128>}, {transform_indices = @transform_4, window_bounds = array<i64: 8, 8, 128>}]} {
    %c0_i32 = arith.constant 0 : i32
    %0 = arith.cmpi eq, %arg1, %c0_i32 : i32
    %1 = arith.extui %0 : i1 to i32
    %c0_i32_0 = arith.constant 0 : i32
    %2 = arith.cmpi ne, %1, %c0_i32_0 : i32
    scf.if %2 {
      %c0_84 = arith.constant 0 : index
      %c0_85 = arith.constant 0 : index
      %189 = vector.load %arg4[%c0_84, %c0_85] : memref<8x128xf32, #tpu.memory_space<vmem>>, vector<8x128xf32>
      %c0_86 = arith.constant 0 : index
      %c0_87 = arith.constant 0 : index
      %190 = vector.load %arg7[%c0_86, %c0_87] : memref<8x128xf32, #tpu.memory_space<vmem>>, vector<8x128xf32>
      tpu.vector_store %arg7[%c0_86, %c0_87], %189 {strides = array<i32>} : memref<8x128xf32, #tpu.memory_space<vmem>>, vector<8x128xf32>,
    } else {
    }
    %c0 = arith.constant 0 : index
    %c0_1 = arith.constant 0 : index
    %3 = vector.load %arg7[%c0, %c0_1] : memref<8x128xf32, #tpu.memory_space<vmem>>, vector<8x128xf32>
    %c0_i32_2 = arith.constant 0 : i32
    %4 = arith.index_cast %c0_i32_2 : i32 to index
    %c0_3 = arith.constant 0 : index
    %c0_4 = arith.constant 0 : index
    %5 = vector.load %arg2[%4, %c0_3, %c0_4] : memref<8x8x128xf32, #tpu.memory_space<vmem>>, vector<1x8x128xf32>
    %6 = vector.shape_cast %5 : vector<1x8x128xf32> to vector<8x128xf32>
    %7 = arith.index_cast %c0_i32_2 : i32 to index
    %c0_5 = arith.constant 0 : index
    %c0_6 = arith.constant 0 : index
    %8 = vector.load %arg3[%7, %c0_5, %c0_6] : memref<8x8x128xf32, #tpu.memory_space<vmem>>, vector<1x8x128xf32>
    %9 = vector.shape_cast %8 : vector<1x8x128xf32> to vector<8x128xf32>
    %10 = arith.mulf %9, %3 : vector<8x128xf32>
    %11 = arith.addf %10, %6 : vector<8x128xf32>
    %cst = arith.constant 1.000000e+00 : f32
    %12 = vector.broadcast %cst : f32 to vector<8x128xf32>
    %13 = arith.subf %11, %12 : vector<8x128xf32>
    %cst_7 = arith.constant 0.000000e+00 : f32
    %14 = vector.broadcast %cst_7 : f32 to vector<8x128xf32>
    %15 = arith.cmpf ogt, %13, %14 : vector<8x128xf32>
    %16 = arith.select %15, %13, %11 : vector<8x128xi1>, vector<8x128xf32>
    %17 = arith.extui %15 : vector<8x128xi1> to vector<8x128xi32>
    %18 = arith.sitofp %17 : vector<8x128xi32> to vector<8x128xf32>
    %19 = arith.index_cast %c0_i32_2 : i32 to index
    %c0_8 = arith.constant 0 : index
    %c0_9 = arith.constant 0 : index
    %20 = vector.load %arg5[%19, %c0_8, %c0_9] : memref<8x8x128xf32, #tpu.memory_space<vmem>>, vector<1x8x128xf32>
    %21 = vector.shape_cast %20 : vector<1x8x128xf32> to vector<8x128xf32>
    %22 = vector.shape_cast %18 : vector<8x128xf32> to vector<1x8x128xf32>
    tpu.vector_store %arg5[%19, %c0_8, %c0_9], %22 {strides = array<i32>} : memref<8x8x128xf32, #tpu.memory_space<vmem>>, vector<1x8x128xf32>,
    %23 = arith.index_cast %c0_i32_2 : i32 to index
    %c0_10 = arith.constant 0 : index
    %c0_11 = arith.constant 0 : index
    %24 = vector.load %arg6[%23, %c0_10, %c0_11] : memref<8x8x128xf32, #tpu.memory_space<vmem>>, vector<1x8x128xf32>
    %25 = vector.shape_cast %24 : vector<1x8x128xf32> to vector<8x128xf32>
    %26 = vector.shape_cast %16 : vector<8x128xf32> to vector<1x8x128xf32>
    tpu.vector_store %arg6[%23, %c0_10, %c0_11], %26 {strides = array<i32>} : memref<8x8x128xf32, #tpu.memory_space<vmem>>, vector<1x8x128xf32>,
    %c1_i32 = arith.constant 1 : i32
    %27 = arith.index_cast %c1_i32 : i32 to index
    %c0_12 = arith.constant 0 : index
    %c0_13 = arith.constant 0 : index
    %28 = vector.load %arg2[%27, %c0_12, %c0_13] : memref<8x8x128xf32, #tpu.memory_space<vmem>>, vector<1x8x128xf32>
    %29 = vector.shape_cast %28 : vector<1x8x128xf32> to vector<8x128xf32>
    %30 = arith.index_cast %c1_i32 : i32 to index
    %c0_14 = arith.constant 0 : index
    %c0_15 = arith.constant 0 : index
    %31 = vector.load %arg3[%30, %c0_14, %c0_15] : memref<8x8x128xf32, #tpu.memory_space<vmem>>, vector<1x8x128xf32>
    %32 = vector.shape_cast %31 : vector<1x8x128xf32> to vector<8x128xf32>
    %33 = arith.mulf %32, %16 : vector<8x128xf32>
    %34 = arith.addf %33, %29 : vector<8x128xf32>
    %cst_16 = arith.constant 1.000000e+00 : f32
    %35 = vector.broadcast %cst_16 : f32 to vector<8x128xf32>
    %36 = arith.subf %34, %35 : vector<8x128xf32>
    %cst_17 = arith.constant 0.000000e+00 : f32
    %37 = vector.broadcast %cst_17 : f32 to vector<8x128xf32>
    %38 = arith.cmpf ogt, %36, %37 : vector<8x128xf32>
    %39 = arith.select %38, %36, %34 : vector<8x128xi1>, vector<8x128xf32>
    %40 = arith.extui %38 : vector<8x128xi1> to vector<8x128xi32>
    %41 = arith.sitofp %40 : vector<8x128xi32> to vector<8x128xf32>
    %42 = arith.index_cast %c1_i32 : i32 to index
    %c0_18 = arith.constant 0 : index
    %c0_19 = arith.constant 0 : index
    %43 = vector.load %arg5[%42, %c0_18, %c0_19] : memref<8x8x128xf32, #tpu.memory_space<vmem>>, vector<1x8x128xf32>
    %44 = vector.shape_cast %43 : vector<1x8x128xf32> to vector<8x128xf32>
    %45 = vector.shape_cast %41 : vector<8x128xf32> to vector<1x8x128xf32>
    tpu.vector_store %arg5[%42, %c0_18, %c0_19], %45 {strides = array<i32>} : memref<8x8x128xf32, #tpu.memory_space<vmem>>, vector<1x8x128xf32>,
    %46 = arith.index_cast %c1_i32 : i32 to index
    %c0_20 = arith.constant 0 : index
    %c0_21 = arith.constant 0 : index
    %47 = vector.load %arg6[%46, %c0_20, %c0_21] : memref<8x8x128xf32, #tpu.memory_space<vmem>>, vector<1x8x128xf32>
    %48 = vector.shape_cast %47 : vector<1x8x128xf32> to vector<8x128xf32>
    %49 = vector.shape_cast %39 : vector<8x128xf32> to vector<1x8x128xf32>
    tpu.vector_store %arg6[%46, %c0_20, %c0_21], %49 {strides = array<i32>} : memref<8x8x128xf32, #tpu.memory_space<vmem>>, vector<1x8x128xf32>,
    %c2_i32 = arith.constant 2 : i32
    %50 = arith.index_cast %c2_i32 : i32 to index
    %c0_22 = arith.constant 0 : index
    %c0_23 = arith.constant 0 : index
    %51 = vector.load %arg2[%50, %c0_22, %c0_23] : memref<8x8x128xf32, #tpu.memory_space<vmem>>, vector<1x8x128xf32>
    %52 = vector.shape_cast %51 : vector<1x8x128xf32> to vector<8x128xf32>
    %53 = arith.index_cast %c2_i32 : i32 to index
    %c0_24 = arith.constant 0 : index
    %c0_25 = arith.constant 0 : index
    %54 = vector.load %arg3[%53, %c0_24, %c0_25] : memref<8x8x128xf32, #tpu.memory_space<vmem>>, vector<1x8x128xf32>
    %55 = vector.shape_cast %54 : vector<1x8x128xf32> to vector<8x128xf32>
    %56 = arith.mulf %55, %39 : vector<8x128xf32>
    %57 = arith.addf %56, %52 : vector<8x128xf32>
    %cst_26 = arith.constant 1.000000e+00 : f32
    %58 = vector.broadcast %cst_26 : f32 to vector<8x128xf32>
    %59 = arith.subf %57, %58 : vector<8x128xf32>
    %cst_27 = arith.constant 0.000000e+00 : f32
    %60 = vector.broadcast %cst_27 : f32 to vector<8x128xf32>
    %61 = arith.cmpf ogt, %59, %60 : vector<8x128xf32>
    %62 = arith.select %61, %59, %57 : vector<8x128xi1>, vector<8x128xf32>
    %63 = arith.extui %61 : vector<8x128xi1> to vector<8x128xi32>
    %64 = arith.sitofp %63 : vector<8x128xi32> to vector<8x128xf32>
    %65 = arith.index_cast %c2_i32 : i32 to index
    %c0_28 = arith.constant 0 : index
    %c0_29 = arith.constant 0 : index
    %66 = vector.load %arg5[%65, %c0_28, %c0_29] : memref<8x8x128xf32, #tpu.memory_space<vmem>>, vector<1x8x128xf32>
    %67 = vector.shape_cast %66 : vector<1x8x128xf32> to vector<8x128xf32>
    %68 = vector.shape_cast %64 : vector<8x128xf32> to vector<1x8x128xf32>
    tpu.vector_store %arg5[%65, %c0_28, %c0_29], %68 {strides = array<i32>} : memref<8x8x128xf32, #tpu.memory_space<vmem>>, vector<1x8x128xf32>,
    %69 = arith.index_cast %c2_i32 : i32 to index
    %c0_30 = arith.constant 0 : index
    %c0_31 = arith.constant 0 : index
    %70 = vector.load %arg6[%69, %c0_30, %c0_31] : memref<8x8x128xf32, #tpu.memory_space<vmem>>, vector<1x8x128xf32>
    %71 = vector.shape_cast %70 : vector<1x8x128xf32> to vector<8x128xf32>
    %72 = vector.shape_cast %62 : vector<8x128xf32> to vector<1x8x128xf32>
    tpu.vector_store %arg6[%69, %c0_30, %c0_31], %72 {strides = array<i32>} : memref<8x8x128xf32, #tpu.memory_space<vmem>>, vector<1x8x128xf32>,
    %c3_i32 = arith.constant 3 : i32
    %73 = arith.index_cast %c3_i32 : i32 to index
    %c0_32 = arith.constant 0 : index
    %c0_33 = arith.constant 0 : index
    %74 = vector.load %arg2[%73, %c0_32, %c0_33] : memref<8x8x128xf32, #tpu.memory_space<vmem>>, vector<1x8x128xf32>
    %75 = vector.shape_cast %74 : vector<1x8x128xf32> to vector<8x128xf32>
    %76 = arith.index_cast %c3_i32 : i32 to index
    %c0_34 = arith.constant 0 : index
    %c0_35 = arith.constant 0 : index
    %77 = vector.load %arg3[%76, %c0_34, %c0_35] : memref<8x8x128xf32, #tpu.memory_space<vmem>>, vector<1x8x128xf32>
    %78 = vector.shape_cast %77 : vector<1x8x128xf32> to vector<8x128xf32>
    %79 = arith.mulf %78, %62 : vector<8x128xf32>
    %80 = arith.addf %79, %75 : vector<8x128xf32>
    %cst_36 = arith.constant 1.000000e+00 : f32
    %81 = vector.broadcast %cst_36 : f32 to vector<8x128xf32>
    %82 = arith.subf %80, %81 : vector<8x128xf32>
    %cst_37 = arith.constant 0.000000e+00 : f32
    %83 = vector.broadcast %cst_37 : f32 to vector<8x128xf32>
    %84 = arith.cmpf ogt, %82, %83 : vector<8x128xf32>
    %85 = arith.select %84, %82, %80 : vector<8x128xi1>, vector<8x128xf32>
    %86 = arith.extui %84 : vector<8x128xi1> to vector<8x128xi32>
    %87 = arith.sitofp %86 : vector<8x128xi32> to vector<8x128xf32>
    %88 = arith.index_cast %c3_i32 : i32 to index
    %c0_38 = arith.constant 0 : index
    %c0_39 = arith.constant 0 : index
    %89 = vector.load %arg5[%88, %c0_38, %c0_39] : memref<8x8x128xf32, #tpu.memory_space<vmem>>, vector<1x8x128xf32>
    %90 = vector.shape_cast %89 : vector<1x8x128xf32> to vector<8x128xf32>
    %91 = vector.shape_cast %87 : vector<8x128xf32> to vector<1x8x128xf32>
    tpu.vector_store %arg5[%88, %c0_38, %c0_39], %91 {strides = array<i32>} : memref<8x8x128xf32, #tpu.memory_space<vmem>>, vector<1x8x128xf32>,
    %92 = arith.index_cast %c3_i32 : i32 to index
    %c0_40 = arith.constant 0 : index
    %c0_41 = arith.constant 0 : index
    %93 = vector.load %arg6[%92, %c0_40, %c0_41] : memref<8x8x128xf32, #tpu.memory_space<vmem>>, vector<1x8x128xf32>
    %94 = vector.shape_cast %93 : vector<1x8x128xf32> to vector<8x128xf32>
    %95 = vector.shape_cast %85 : vector<8x128xf32> to vector<1x8x128xf32>
    tpu.vector_store %arg6[%92, %c0_40, %c0_41], %95 {strides = array<i32>} : memref<8x8x128xf32, #tpu.memory_space<vmem>>, vector<1x8x128xf32>,
    %c4_i32 = arith.constant 4 : i32
    %96 = arith.index_cast %c4_i32 : i32 to index
    %c0_42 = arith.constant 0 : index
    %c0_43 = arith.constant 0 : index
    %97 = vector.load %arg2[%96, %c0_42, %c0_43] : memref<8x8x128xf32, #tpu.memory_space<vmem>>, vector<1x8x128xf32>
    %98 = vector.shape_cast %97 : vector<1x8x128xf32> to vector<8x128xf32>
    %99 = arith.index_cast %c4_i32 : i32 to index
    %c0_44 = arith.constant 0 : index
    %c0_45 = arith.constant 0 : index
    %100 = vector.load %arg3[%99, %c0_44, %c0_45] : memref<8x8x128xf32, #tpu.memory_space<vmem>>, vector<1x8x128xf32>
    %101 = vector.shape_cast %100 : vector<1x8x128xf32> to vector<8x128xf32>
    %102 = arith.mulf %101, %85 : vector<8x128xf32>
    %103 = arith.addf %102, %98 : vector<8x128xf32>
    %cst_46 = arith.constant 1.000000e+00 : f32
    %104 = vector.broadcast %cst_46 : f32 to vector<8x128xf32>
    %105 = arith.subf %103, %104 : vector<8x128xf32>
    %cst_47 = arith.constant 0.000000e+00 : f32
    %106 = vector.broadcast %cst_47 : f32 to vector<8x128xf32>
    %107 = arith.cmpf ogt, %105, %106 : vector<8x128xf32>
    %108 = arith.select %107, %105, %103 : vector<8x128xi1>, vector<8x128xf32>
    %109 = arith.extui %107 : vector<8x128xi1> to vector<8x128xi32>
    %110 = arith.sitofp %109 : vector<8x128xi32> to vector<8x128xf32>
    %111 = arith.index_cast %c4_i32 : i32 to index
    %c0_48 = arith.constant 0 : index
    %c0_49 = arith.constant 0 : index
    %112 = vector.load %arg5[%111, %c0_48, %c0_49] : memref<8x8x128xf32, #tpu.memory_space<vmem>>, vector<1x8x128xf32>
    %113 = vector.shape_cast %112 : vector<1x8x128xf32> to vector<8x128xf32>
    %114 = vector.shape_cast %110 : vector<8x128xf32> to vector<1x8x128xf32>
    tpu.vector_store %arg5[%111, %c0_48, %c0_49], %114 {strides = array<i32>} : memref<8x8x128xf32, #tpu.memory_space<vmem>>, vector<1x8x128xf32>,
    %115 = arith.index_cast %c4_i32 : i32 to index
    %c0_50 = arith.constant 0 : index
    %c0_51 = arith.constant 0 : index
    %116 = vector.load %arg6[%115, %c0_50, %c0_51] : memref<8x8x128xf32, #tpu.memory_space<vmem>>, vector<1x8x128xf32>
    %117 = vector.shape_cast %116 : vector<1x8x128xf32> to vector<8x128xf32>
    %118 = vector.shape_cast %108 : vector<8x128xf32> to vector<1x8x128xf32>
    tpu.vector_store %arg6[%115, %c0_50, %c0_51], %118 {strides = array<i32>} : memref<8x8x128xf32, #tpu.memory_space<vmem>>, vector<1x8x128xf32>,
    %c5_i32 = arith.constant 5 : i32
    %119 = arith.index_cast %c5_i32 : i32 to index
    %c0_52 = arith.constant 0 : index
    %c0_53 = arith.constant 0 : index
    %120 = vector.load %arg2[%119, %c0_52, %c0_53] : memref<8x8x128xf32, #tpu.memory_space<vmem>>, vector<1x8x128xf32>
    %121 = vector.shape_cast %120 : vector<1x8x128xf32> to vector<8x128xf32>
    %122 = arith.index_cast %c5_i32 : i32 to index
    %c0_54 = arith.constant 0 : index
    %c0_55 = arith.constant 0 : index
    %123 = vector.load %arg3[%122, %c0_54, %c0_55] : memref<8x8x128xf32, #tpu.memory_space<vmem>>, vector<1x8x128xf32>
    %124 = vector.shape_cast %123 : vector<1x8x128xf32> to vector<8x128xf32>
    %125 = arith.mulf %124, %108 : vector<8x128xf32>
    %126 = arith.addf %125, %121 : vector<8x128xf32>
    %cst_56 = arith.constant 1.000000e+00 : f32
    %127 = vector.broadcast %cst_56 : f32 to vector<8x128xf32>
    %128 = arith.subf %126, %127 : vector<8x128xf32>
    %cst_57 = arith.constant 0.000000e+00 : f32
    %129 = vector.broadcast %cst_57 : f32 to vector<8x128xf32>
    %130 = arith.cmpf ogt, %128, %129 : vector<8x128xf32>
    %131 = arith.select %130, %128, %126 : vector<8x128xi1>, vector<8x128xf32>
    %132 = arith.extui %130 : vector<8x128xi1> to vector<8x128xi32>
    %133 = arith.sitofp %132 : vector<8x128xi32> to vector<8x128xf32>
    %134 = arith.index_cast %c5_i32 : i32 to index
    %c0_58 = arith.constant 0 : index
    %c0_59 = arith.constant 0 : index
    %135 = vector.load %arg5[%134, %c0_58, %c0_59] : memref<8x8x128xf32, #tpu.memory_space<vmem>>, vector<1x8x128xf32>
    %136 = vector.shape_cast %135 : vector<1x8x128xf32> to vector<8x128xf32>
    %137 = vector.shape_cast %133 : vector<8x128xf32> to vector<1x8x128xf32>
    tpu.vector_store %arg5[%134, %c0_58, %c0_59], %137 {strides = array<i32>} : memref<8x8x128xf32, #tpu.memory_space<vmem>>, vector<1x8x128xf32>,
    %138 = arith.index_cast %c5_i32 : i32 to index
    %c0_60 = arith.constant 0 : index
    %c0_61 = arith.constant 0 : index
    %139 = vector.load %arg6[%138, %c0_60, %c0_61] : memref<8x8x128xf32, #tpu.memory_space<vmem>>, vector<1x8x128xf32>
    %140 = vector.shape_cast %139 : vector<1x8x128xf32> to vector<8x128xf32>
    %141 = vector.shape_cast %131 : vector<8x128xf32> to vector<1x8x128xf32>
    tpu.vector_store %arg6[%138, %c0_60, %c0_61], %141 {strides = array<i32>} : memref<8x8x128xf32, #tpu.memory_space<vmem>>, vector<1x8x128xf32>,
    %c6_i32 = arith.constant 6 : i32
    %142 = arith.index_cast %c6_i32 : i32 to index
    %c0_62 = arith.constant 0 : index
    %c0_63 = arith.constant 0 : index
    %143 = vector.load %arg2[%142, %c0_62, %c0_63] : memref<8x8x128xf32, #tpu.memory_space<vmem>>, vector<1x8x128xf32>
    %144 = vector.shape_cast %143 : vector<1x8x128xf32> to vector<8x128xf32>
    %145 = arith.index_cast %c6_i32 : i32 to index
    %c0_64 = arith.constant 0 : index
    %c0_65 = arith.constant 0 : index
    %146 = vector.load %arg3[%145, %c0_64, %c0_65] : memref<8x8x128xf32, #tpu.memory_space<vmem>>, vector<1x8x128xf32>
    %147 = vector.shape_cast %146 : vector<1x8x128xf32> to vector<8x128xf32>
    %148 = arith.mulf %147, %131 : vector<8x128xf32>
    %149 = arith.addf %148, %144 : vector<8x128xf32>
    %cst_66 = arith.constant 1.000000e+00 : f32
    %150 = vector.broadcast %cst_66 : f32 to vector<8x128xf32>
    %151 = arith.subf %149, %150 : vector<8x128xf32>
    %cst_67 = arith.constant 0.000000e+00 : f32
    %152 = vector.broadcast %cst_67 : f32 to vector<8x128xf32>
    %153 = arith.cmpf ogt, %151, %152 : vector<8x128xf32>
    %154 = arith.select %153, %151, %149 : vector<8x128xi1>, vector<8x128xf32>
    %155 = arith.extui %153 : vector<8x128xi1> to vector<8x128xi32>
    %156 = arith.sitofp %155 : vector<8x128xi32> to vector<8x128xf32>
    %157 = arith.index_cast %c6_i32 : i32 to index
    %c0_68 = arith.constant 0 : index
    %c0_69 = arith.constant 0 : index
    %158 = vector.load %arg5[%157, %c0_68, %c0_69] : memref<8x8x128xf32, #tpu.memory_space<vmem>>, vector<1x8x128xf32>
    %159 = vector.shape_cast %158 : vector<1x8x128xf32> to vector<8x128xf32>
    %160 = vector.shape_cast %156 : vector<8x128xf32> to vector<1x8x128xf32>
    tpu.vector_store %arg5[%157, %c0_68, %c0_69], %160 {strides = array<i32>} : memref<8x8x128xf32, #tpu.memory_space<vmem>>, vector<1x8x128xf32>,
    %161 = arith.index_cast %c6_i32 : i32 to index
    %c0_70 = arith.constant 0 : index
    %c0_71 = arith.constant 0 : index
    %162 = vector.load %arg6[%161, %c0_70, %c0_71] : memref<8x8x128xf32, #tpu.memory_space<vmem>>, vector<1x8x128xf32>
    %163 = vector.shape_cast %162 : vector<1x8x128xf32> to vector<8x128xf32>
    %164 = vector.shape_cast %154 : vector<8x128xf32> to vector<1x8x128xf32>
    tpu.vector_store %arg6[%161, %c0_70, %c0_71], %164 {strides = array<i32>} : memref<8x8x128xf32, #tpu.memory_space<vmem>>, vector<1x8x128xf32>,
    %c7_i32 = arith.constant 7 : i32
    %165 = arith.index_cast %c7_i32 : i32 to index
    %c0_72 = arith.constant 0 : index
    %c0_73 = arith.constant 0 : index
    %166 = vector.load %arg2[%165, %c0_72, %c0_73] : memref<8x8x128xf32, #tpu.memory_space<vmem>>, vector<1x8x128xf32>
    %167 = vector.shape_cast %166 : vector<1x8x128xf32> to vector<8x128xf32>
    %168 = arith.index_cast %c7_i32 : i32 to index
    %c0_74 = arith.constant 0 : index
    %c0_75 = arith.constant 0 : index
    %169 = vector.load %arg3[%168, %c0_74, %c0_75] : memref<8x8x128xf32, #tpu.memory_space<vmem>>, vector<1x8x128xf32>
    %170 = vector.shape_cast %169 : vector<1x8x128xf32> to vector<8x128xf32>
    %171 = arith.mulf %170, %154 : vector<8x128xf32>
    %172 = arith.addf %171, %167 : vector<8x128xf32>
    %cst_76 = arith.constant 1.000000e+00 : f32
    %173 = vector.broadcast %cst_76 : f32 to vector<8x128xf32>
    %174 = arith.subf %172, %173 : vector<8x128xf32>
    %cst_77 = arith.constant 0.000000e+00 : f32
    %175 = vector.broadcast %cst_77 : f32 to vector<8x128xf32>
    %176 = arith.cmpf ogt, %174, %175 : vector<8x128xf32>
    %177 = arith.select %176, %174, %172 : vector<8x128xi1>, vector<8x128xf32>
    %178 = arith.extui %176 : vector<8x128xi1> to vector<8x128xi32>
    %179 = arith.sitofp %178 : vector<8x128xi32> to vector<8x128xf32>
    %180 = arith.index_cast %c7_i32 : i32 to index
    %c0_78 = arith.constant 0 : index
    %c0_79 = arith.constant 0 : index
    %181 = vector.load %arg5[%180, %c0_78, %c0_79] : memref<8x8x128xf32, #tpu.memory_space<vmem>>, vector<1x8x128xf32>
    %182 = vector.shape_cast %181 : vector<1x8x128xf32> to vector<8x128xf32>
    %183 = vector.shape_cast %179 : vector<8x128xf32> to vector<1x8x128xf32>
    tpu.vector_store %arg5[%180, %c0_78, %c0_79], %183 {strides = array<i32>} : memref<8x8x128xf32, #tpu.memory_space<vmem>>, vector<1x8x128xf32>,
    %184 = arith.index_cast %c7_i32 : i32 to index
    %c0_80 = arith.constant 0 : index
    %c0_81 = arith.constant 0 : index
    %185 = vector.load %arg6[%184, %c0_80, %c0_81] : memref<8x8x128xf32, #tpu.memory_space<vmem>>, vector<1x8x128xf32>
    %186 = vector.shape_cast %185 : vector<1x8x128xf32> to vector<8x128xf32>
    %187 = vector.shape_cast %177 : vector<8x128xf32> to vector<1x8x128xf32>
    tpu.vector_store %arg6[%184, %c0_80, %c0_81], %187 {strides = array<i32>} : memref<8x8x128xf32, #tpu.memory_space<vmem>>, vector<1x8x128xf32>,
    %c8_i32 = arith.constant 8 : i32
    %c0_82 = arith.constant 0 : index
    %c0_83 = arith.constant 0 : index
    %188 = vector.load %arg7[%c0_82, %c0_83] : memref<8x128xf32, #tpu.memory_space<vmem>>, vector<8x128xf32>
    tpu.vector_store %arg7[%c0_82, %c0_83], %177 {strides = array<i32>} : memref<8x128xf32, #tpu.memory_space<vmem>>, vector<8x128xf32>,
    return
  }
  func.func @transform_0(%arg0: i32, %arg1: i32) -> (i32, i32, i32) {
    %c0_i32 = arith.constant 0 : i32
    %c0_i32_0 = arith.constant 0 : i32
    return %arg1, %arg0, %c0_i32 : i32, i32, i32
  }
  func.func @transform_1(%arg0: i32, %arg1: i32) -> (i32, i32, i32) {
    %c0_i32 = arith.constant 0 : i32
    %c0_i32_0 = arith.constant 0 : i32
    return %arg1, %arg0, %c0_i32 : i32, i32, i32
  }
  func.func @transform_2(%arg0: i32, %arg1: i32) -> (i32, i32) {
    %c0_i32 = arith.constant 0 : i32
    %c0_i32_0 = arith.constant 0 : i32
    return %arg0, %c0_i32 : i32, i32
  }
  func.func @transform_3(%arg0: i32, %arg1: i32) -> (i32, i32, i32) {
    %c0_i32 = arith.constant 0 : i32
    %c0_i32_0 = arith.constant 0 : i32
    return %arg1, %arg0, %c0_i32 : i32, i32, i32
  }
  func.func @transform_4(%arg0: i32, %arg1: i32) -> (i32, i32, i32) {
    %c0_i32 = arith.constant 0 : i32
    %c0_i32_0 = arith.constant 0 : i32
    return %arg1, %arg0, %c0_i32 : i32, i32, i32
  }
}

</mosaic_0001>

<llo_original>
// kernel: _lambda_.1
$region0: #{_lambda_.1}
  #allocation0 [shape = 'u32[]', space=smem, size = 0x4, offset = 0x4, fixed_abs, tag = 'smem constant byte address 0x4 - core index']
  #allocation1 [shape = 'u32[144,128]{1,0:T(1,128)}', space=vmem, size = 0x12000, scoped, tag = 'internal scratch']
  #allocation2 [shape = 'f32[8,128]{1,0:T(8,128)}', space=vmem, size = 0x1000, scoped, tag = 'scratch operand']
  %s0 = inlined_call_operand.hbm [shape: f32[8,8,128], index: 0, kind: input, shape index: {}]
  %s1 = inlined_call_operand.hbm [shape: f32[8,8,128], index: 1, kind: input, shape index: {}]
  %s2 = inlined_call_operand.vmem [shape: f32[8,128], index: 2, kind: input, shape index: {}]
  %s3 = inlined_call_operand.hbm [shape: f32[8,8,128], index: 3, kind: output, shape index: {0}]
  %s4 = inlined_call_operand.hbm [shape: f32[8,8,128], index: 4, kind: output, shape index: {1}]
  %5 = xla_tuple %s3, %s4
  %s6 = sld [smem:[#allocation0]]
  $region42: #{_lambda_.1} parent=0
    _
  %s8 = ssub.s32 1, %s6
  %s9 = scalar_select 0, %s8, %s6
  $region1: #{_lambda_.1} parent=0
    #allocation3 [shape = 'u8[32768]{0}', space=vmem, size = 0x8000, scoped, tag = 'input window, operand 0, single buffered']
    #allocation4 [shape = 's32[1]{0}', space=sflag, size = 0x4, scoped, tag = 'scoped memory for _lambda_.1']
    #allocation5 [shape = 's32[1]{0}', space=sflag, size = 0x4, scoped, tag = 'scoped memory for _lambda_.1']
    #allocation6 [shape = 'u8[32768]{0}', space=vmem, size = 0x8000, scoped, tag = 'input window, operand 1, single buffered']
    #allocation7 [shape = 's32[1]{0}', space=sflag, size = 0x4, scoped, tag = 'scoped memory for _lambda_.1']
    #allocation8 [shape = 'u8[32768]{0}', space=vmem, size = 0x8000, scoped, tag = 'output window, operand 0, single buffered']
    #allocation9 [shape = 'u8[32768]{0}', space=vmem, size = 0x8000, scoped, tag = 'output window, operand 1, single buffered']
    #allocation10 [shape = 's32[1]{0}', space=sflag, size = 0x4, scoped, tag = 'scoped memory for _lambda_.1']
    %10 = vsyncpa [#allocation4], 0
    %11 = vsyncpa [#allocation7], 0
    %12 = vsyncpa [#allocation5], 0
    %13 = vsyncpa [#allocation10], 0
    // Predicated region
    $region2: #{_lambda_.1} parent=1 // pred_check
      _
    $region3: #{_lambda_.1} parent=1 // pred_check_branch
      %15 = sbr.rel (0) target = $region5
    $region4: #{_lambda_.1} parent=1 // pred_region
      %s17 = ssub.s32 1024, 1024
      %18 = vsyncadd [#allocation4], %s17
      %s19 = sshll.u32 [#allocation3], 4
      %s20 = int_to_ptr.vmem [resolvable:$true] %s19
      %25 = dma.hbm_to_vmem [thread:$0]  %s0, 1024, %s20, [#allocation4], 128, 128, 8
    $region5: #{_lambda_.1} parent=1 // pred_fallthru
      _
    // Predicated region
    $region6: #{_lambda_.1} parent=1 // pred_check
      _
    $region7: #{_lambda_.1} parent=1 // pred_check_branch
      %27 = sbr.rel (0) target = $region9
    $region8: #{_lambda_.1} parent=1 // pred_region
      %s29 = ssub.s32 1024, 1024
      %30 = vsyncadd [#allocation7], %s29
      %s31 = sshll.u32 [#allocation6], 4
      %s32 = int_to_ptr.vmem [resolvable:$true] %s31
      %37 = dma.hbm_to_vmem [thread:$0]  %s1, 1024, %s32, [#allocation7], 128, 128, 8
    $region9: #{_lambda_.1} parent=1 // pred_fallthru
      _
    // Predicated region
    $region10: #{_lambda_.1} parent=1 // pred_check
      _
    $region11: #{_lambda_.1} parent=1 // pred_check_branch
      %39 = sbr.rel (0) target = $region13
    $region12: #{_lambda_.1} parent=1 // pred_region
      _
    $region13: #{_lambda_.1} parent=1 // pred_fallthru
      _
    // Predicated region
    $region14: #{_lambda_.1} parent=1 // pred_check
      _
    $region15: #{_lambda_.1} parent=1 // pred_check_branch
      %41 = sbr.rel (0) target = $region17
    $region16: #{_lambda_.1} parent=1 // pred_region
      %42 = dma.done [#allocation4], 1024
    $region17: #{_lambda_.1} parent=1 // pred_fallthru
      _
    // Predicated region
    $region18: #{_lambda_.1} parent=1 // pred_check
      _
    $region19: #{_lambda_.1} parent=1 // pred_check_branch
      %44 = sbr.rel (0) target = $region21
    $region20: #{_lambda_.1} parent=1 // pred_region
      %45 = dma.done [#allocation7], 1024
    $region21: #{_lambda_.1} parent=1 // pred_fallthru
      _
    %p46 = scmp.eq.s32.totalorder 0, 0
    // Predicated region
    $region22: #{_lambda_.1} parent=1 // pred_check
      %p47 = pneg %p46
    $region23: #{_lambda_.1} parent=1 // pred_check_branch
      %49 = sbr.rel (%p47) target = $region25
    $region24: #{_lambda_.1} parent=1 // pred_region
      %v50 = vld [vmem:[%s2] sm:$0xff]
      %51 = vst [vmem:[#allocation2] sm:$0xff] %v50
    $region25: #{_lambda_.1} parent=1 // pred_fallthru
      _
    %v52 = vld [vmem:[#allocation2] sm:$0xff]
    %v53 = vld [vmem:[#allocation3] sm:$0xff]
    %v54 = vld [vmem:[#allocation6] sm:$0xff]
    %v55 = vmul.f32 %v54, %v52
    %v56 = vadd.f32 %v55, %v53
    %v57 = vsub.f32 %v56, 1.0
    %vm58 = vcmp.gt.f32.partialorder %v57, 0.0
    %v59 = vsel %vm58, %v57, %v56
    %v60 = vsel %vm58, 1, 0
    %v61 = vcvt.s32.f32 %v60
    %62 = vst [vmem:[#allocation8] sm:$0xff] %v61
    %63 = vst [vmem:[#allocation9] sm:$0xff] %v59
    %s64 = scalar_lea.vmem [#allocation3], 8
    %v65 = vld [vmem:[%s64] sm:$0xff]
    %s66 = scalar_lea.vmem [#allocation6], 8
    %v67 = vld [vmem:[%s66] sm:$0xff]
    %v68 = vmul.f32 %v67, %v59
    %v69 = vadd.f32 %v68, %v65
    %v70 = vsub.f32 %v69, 1.0
    %vm71 = vcmp.gt.f32.partialorder %v70, 0.0
    %v72 = vsel %vm71, %v70, %v69
    %v73 = vsel %vm71, 1, 0
    %v74 = vcvt.s32.f32 %v73
    %s75 = scalar_lea.vmem [#allocation8], 8
    %76 = vst [vmem:[%s75] sm:$0xff] %v74
    %s77 = scalar_lea.vmem [#allocation9], 8
    %78 = vst [vmem:[%s77] sm:$0xff] %v72
    %s79 = scalar_lea.vmem [#allocation3], 16
    %v80 = vld [vmem:[%s79] sm:$0xff]
    %s81 = scalar_lea.vmem [#allocation6], 16
    %v82 = vld [vmem:[%s81] sm:$0xff]
    %v83 = vmul.f32 %v82, %v72
    %v84 = vadd.f32 %v83, %v80
    %v85 = vsub.f32 %v84, 1.0
    %vm86 = vcmp.gt.f32.partialorder %v85, 0.0
    %v87 = vsel %vm86, %v85, %v84
    %v88 = vsel %vm86, 1, 0
    %v89 = vcvt.s32.f32 %v88
    %s90 = scalar_lea.vmem [#allocation8], 16
    %91 = vst [vmem:[%s90] sm:$0xff] %v89
    %s92 = scalar_lea.vmem [#allocation9], 16
    %93 = vst [vmem:[%s92] sm:$0xff] %v87
    %s94 = scalar_lea.vmem [#allocation3], 24
    %v95 = vld [vmem:[%s94] sm:$0xff]
    %s96 = scalar_lea.vmem [#allocation6], 24
    %v97 = vld [vmem:[%s96] sm:$0xff]
    %v98 = vmul.f32 %v97, %v87
    %v99 = vadd.f32 %v98, %v95
    %v100 = vsub.f32 %v99, 1.0
    %vm101 = vcmp.gt.f32.partialorder %v100, 0.0
    %v102 = vsel %vm101, %v100, %v99
    %v103 = vsel %vm101, 1, 0
    %v104 = vcvt.s32.f32 %v103
    %s105 = scalar_lea.vmem [#allocation8], 24
    %106 = vst [vmem:[%s105] sm:$0xff] %v104
    %s107 = scalar_lea.vmem [#allocation9], 24
    %108 = vst [vmem:[%s107] sm:$0xff] %v102
    %s109 = scalar_lea.vmem [#allocation3], 32
    %v110 = vld [vmem:[%s109] sm:$0xff]
    %s111 = scalar_lea.vmem [#allocation6], 32
    %v112 = vld [vmem:[%s111] sm:$0xff]
    %v113 = vmul.f32 %v112, %v102
    %v114 = vadd.f32 %v113, %v110
    %v115 = vsub.f32 %v114, 1.0
    %vm116 = vcmp.gt.f32.partialorder %v115, 0.0
    %v117 = vsel %vm116, %v115, %v114
    %v118 = vsel %vm116, 1, 0
    %v119 = vcvt.s32.f32 %v118
    %s120 = scalar_lea.vmem [#allocation8], 32
    %121 = vst [vmem:[%s120] sm:$0xff] %v119
    %s122 = scalar_lea.vmem [#allocation9], 32
    %123 = vst [vmem:[%s122] sm:$0xff] %v117
    %s124 = scalar_lea.vmem [#allocation3], 40
    %v125 = vld [vmem:[%s124] sm:$0xff]
    %s126 = scalar_lea.vmem [#allocation6], 40
    %v127 = vld [vmem:[%s126] sm:$0xff]
    %v128 = vmul.f32 %v127, %v117
    %v129 = vadd.f32 %v128, %v125
    %v130 = vsub.f32 %v129, 1.0
    %vm131 = vcmp.gt.f32.partialorder %v130, 0.0
    %v132 = vsel %vm131, %v130, %v129
    %v133 = vsel %vm131, 1, 0
    %v134 = vcvt.s32.f32 %v133
    %s135 = scalar_lea.vmem [#allocation8], 40
    %136 = vst [vmem:[%s135] sm:$0xff] %v134
    %s137 = scalar_lea.vmem [#allocation9], 40
    %138 = vst [vmem:[%s137] sm:$0xff] %v132
    %s139 = scalar_lea.vmem [#allocation3], 48
    %v140 = vld [vmem:[%s139] sm:$0xff]
    %s141 = scalar_lea.vmem [#allocation6], 48
    %v142 = vld [vmem:[%s141] sm:$0xff]
    %v143 = vmul.f32 %v142, %v132
    %v144 = vadd.f32 %v143, %v140
    %v145 = vsub.f32 %v144, 1.0
    %vm146 = vcmp.gt.f32.partialorder %v145, 0.0
    %v147 = vsel %vm146, %v145, %v144
    %v148 = vsel %vm146, 1, 0
    %v149 = vcvt.s32.f32 %v148
    %s150 = scalar_lea.vmem [#allocation8], 48
    %151 = vst [vmem:[%s150] sm:$0xff] %v149
    %s152 = scalar_lea.vmem [#allocation9], 48
    %153 = vst [vmem:[%s152] sm:$0xff] %v147
    %s154 = scalar_lea.vmem [#allocation3], 56
    %v155 = vld [vmem:[%s154] sm:$0xff]
    %s156 = scalar_lea.vmem [#allocation6], 56
    %v157 = vld [vmem:[%s156] sm:$0xff]
    %v158 = vmul.f32 %v157, %v147
    %v159 = vadd.f32 %v158, %v155
    %v160 = vsub.f32 %v159, 1.0
    %vm161 = vcmp.gt.f32.partialorder %v160, 0.0
    %v162 = vsel %vm161, %v160, %v159
    %v163 = vsel %vm161, 1, 0
    %v164 = vcvt.s32.f32 %v163
    %s165 = scalar_lea.vmem [#allocation8], 56
    %166 = vst [vmem:[%s165] sm:$0xff] %v164
    %s167 = scalar_lea.vmem [#allocation9], 56
    %168 = vst [vmem:[%s167] sm:$0xff] %v162
    %169 = vst [vmem:[#allocation2] sm:$0xff] %v162
    // Predicated region
    $region26: #{_lambda_.1} parent=1 // pred_check
      _
    $region27: #{_lambda_.1} parent=1 // pred_check_branch
      %171 = sbr.rel (0) target = $region29
    $region28: #{_lambda_.1} parent=1 // pred_region
      %s173 = ssub.s32 1024, 1024
      %174 = vsyncadd [#allocation5], %s173
      %s175 = sshll.u32 [#allocation8], 4
      %s176 = int_to_ptr.vmem [resolvable:$true] %s175
      %181 = dma.vmem_to_hbm [thread:$0]  %s176, 1024, %s3, [#allocation5], 128, 128, 8
    $region29: #{_lambda_.1} parent=1 // pred_fallthru
      _
    // Predicated region
    $region30: #{_lambda_.1} parent=1 // pred_check
      _
    $region31: #{_lambda_.1} parent=1 // pred_check_branch
      %183 = sbr.rel (0) target = $region33
    $region32: #{_lambda_.1} parent=1 // pred_region
      %s185 = ssub.s32 1024, 1024
      %186 = vsyncadd [#allocation10], %s185
      %s187 = sshll.u32 [#allocation9], 4
      %s188 = int_to_ptr.vmem [resolvable:$true] %s187
      %193 = dma.vmem_to_hbm [thread:$0]  %s188, 1024, %s4, [#allocation10], 128, 128, 8
    $region33: #{_lambda_.1} parent=1 // pred_fallthru
      _
    // Predicated region
    $region34: #{_lambda_.1} parent=1 // pred_check
      _
    $region35: #{_lambda_.1} parent=1 // pred_check_branch
      %195 = sbr.rel (0) target = $region37
    $region36: #{_lambda_.1} parent=1 // pred_region
      %196 = dma.done [#allocation5], 1024
    $region37: #{_lambda_.1} parent=1 // pred_fallthru
      _
    // Predicated region
    $region38: #{_lambda_.1} parent=1 // pred_check
      _
    $region39: #{_lambda_.1} parent=1 // pred_check_branch
      %198 = sbr.rel (0) target = $region41
    $region40: #{_lambda_.1} parent=1 // pred_region
      %199 = dma.done [#allocation10], 1024
    $region41: #{_lambda_.1} parent=1 // pred_fallthru
      _
    %200 = vsyncpa [#allocation4], 1
    %201 = vsyncpa [#allocation7], 1
    %202 = vsyncpa [#allocation5], 1
    %203 = vsyncpa [#allocation10], 1

</llo_original>
